<compile_context>
chip_gen: v7x
topology: tpu7x:2x2x1
jax: 0.10.0
libtpu: 0.0.40
codegen_flags: <defaults>
</compile_context>

<pallas_src>
import functools

import jax
import jax.numpy as jnp
import numpy as np
from jax.experimental import pallas as pl
from jax.experimental.pallas import tpu as pltpu

EPS = 1e-5


# --------------------------------------------------------------------------- #
# Generation-aware VMEM budgets & tile pickers
# --------------------------------------------------------------------------- #
@functools.lru_cache(maxsize=None)
def _vmem_limits():
    """Returns (vmem_limit_bytes for CompilerParams, per-kernel tile budget)."""
    try:
        info = pltpu.get_tpu_info()
        cap = int(getattr(info, "vmem_capacity_bytes", 64 * 1024 * 1024))
    except Exception:  # no TPU info available -> conservative (v7x-safe) default
        cap = 64 * 1024 * 1024
    vmem_limit = min((3 * cap) // 4, 96 * 1024 * 1024)  # ~48 MiB v7x, ~96 MiB v5e/v6e
    tile_budget = vmem_limit // 2                        # headroom for temps / stats
    return vmem_limit, tile_budget


def _round_up(x, m):
    return ((x + m - 1) // m) * m


def _bytes_per_elem(itemsize):
    # x-in + y-out double-buffered pipeline copies (x dtype) + ~4 f32 temporaries
    return 4 * itemsize + 16


def _pick_feature_tile(rows, F, itemsize, tile_budget, *, min_tiles=2):
    """Largest lane-dense feature tile fitting `tile_budget`, keeping at least
    `min_tiles` feature tiles (when F allows) so v7x's two TCs both get work."""
    if F <= 128:
        return F  # single full block; block dim == array dim is always legal
    n128 = pl.cdiv(F, 128)
    per_group = _bytes_per_elem(itemsize) * rows * 128
    max_groups = max(1, tile_budget // per_group)
    if n128 >= min_tiles:
        max_groups = min(max_groups, pl.cdiv(n128, min_tiles))
    return 128 * int(min(max_groups, n128))


def _pick_two_pass_tiles(B, F, itemsize, tile_budget, max_batch_tile=None):
    """Feature / batch tiles for the large-B two-pass path."""
    if F <= 128:
        tf = F
    else:
        n128 = pl.cdiv(F, 128)
        groups = min(n128, 4)                 # modest feature tile -> big batch tile
        if n128 >= 2:
            groups = min(groups, pl.cdiv(n128, 2))
        tf = 128 * max(1, groups)
    per_row = _bytes_per_elem(itemsize) * tf
    tb = max(8, ((tile_budget // per_row) // 8) * 8)
    tb = min(tb, _round_up(B, 8))
    if max_batch_tile is not None:
        tb = max(8, min(tb, (max_batch_tile // 8) * 8))
    return tf, int(tb)


# --------------------------------------------------------------------------- #
# Kernels
# --------------------------------------------------------------------------- #
def _fused_kernel(x_ref, rm_ref, rv_ref, cnt_ref,
                  y_ref, new_rm_ref, new_rv_ref,
                  *, batch_count, training, unnorm, norm_only, eps):
    """Single-pass path: the full batch column is resident per feature tile."""
    x = x_ref[...].astype(jnp.float32)          # (B, TF); stats always in f32
    mean = rm_ref[...]                          # (1, TF)
    var = rv_ref[...]                           # (1, TF)

    if training:
        count = cnt_ref[0, 0]                   # scalar, SMEM
        # batch statistics over axis 0 (torch: mean(0), var(0) -> unbiased, N-1)
        bmean = jnp.mean(x, axis=0, keepdims=True)
        diff = x - bmean
        # NOTE: matches torch unbiased var; NaN/Inf for batch_count == 1 (as in torch).
        bvar = jnp.sum(diff * diff, axis=0, keepdims=True) * (1.0 / (batch_count - 1.0))

        # _update_mean_var_count_from_moments (same op order as the PyTorch code)
        delta = bmean - mean
        tot_count = count + batch_count
        inv_tot = 1.0 / tot_count               # scalar divide, reused
        new_mean = mean + delta * (batch_count * inv_tot)
        m2 = (var * count + bvar * batch_count
              + delta * delta * (count * batch_count * inv_tot))
        new_var = m2 * inv_tot
        cur_mean, cur_var = new_mean, new_var
    else:
        cur_mean, cur_var = mean, var

    new_rm_ref[...] = cur_mean
    new_rv_ref[...] = cur_var

    if unnorm:
        std = jnp.sqrt(cur_var + eps)
        y = jnp.clip(x, -5.0, 5.0)
        y = std * y + cur_mean
    elif norm_only:
        y = x * jax.lax.rsqrt(cur_var + eps)    # EUP rsqrt
    else:
        y = (x - cur_mean) * jax.lax.rsqrt(cur_var + eps)
        y = jnp.clip(y, -5.0, 5.0)
    y_ref[...] = y.astype(y_ref.dtype)


def _stats_kernel(x_ref, rm_ref, rv_ref, cnt_ref,
                  new_rm_ref, new_rv_ref,
                  sum_ref, sumsq_ref,
                  *, batch_count, batch_tile, mask_batch):
    """Batch-tiled sum / sum-of-squares accumulation; finalize at last B tile."""
    b = pl.program_id(1)

    @pl.when(b == 0)
    def _():
        sum_ref[...] = jnp.zeros_like(sum_ref)
        sumsq_ref[...] = jnp.zeros_like(sumsq_ref)

    x = x_ref[...].astype(jnp.float32)          # (TB, TF)
    if mask_batch:                              # last partial batch tile -> zero pad rows
        row = jax.lax.broadcasted_iota(jnp.int32, x.shape, 0)
        x = jnp.where(row + b * batch_tile < batch_count, x, 0.0)
    sum_ref[...] += jnp.sum(x, axis=0, keepdims=True)
    sumsq_ref[...] += jnp.sum(x * x, axis=0, keepdims=True)

    @pl.when(b == pl.num_programs(1) - 1)
    def _():
        count = cnt_ref[0, 0]
        mean = rm_ref[...]
        var = rv_ref[...]
        fb = float(batch_count)
        bmean = sum_ref[...] * (1.0 / fb)
        # single-pass unbiased variance; NaN/Inf for batch_count == 1 (as in torch)
        bvar = (sumsq_ref[...] - fb * bmean * bmean) * (1.0 / (fb - 1.0))
        delta = bmean - mean
        tot_count = count + fb
        inv_tot = 1.0 / tot_count
        new_rm_ref[...] = mean + delta * (fb * inv_tot)
        m2 = var * count + bvar * fb + delta * delta * (count * fb * inv_tot)
        new_rv_ref[...] = m2 * inv_tot


def _apply_kernel(x_ref, mean_ref, var_ref, y_ref, *, unnorm, norm_only, eps):
    """Batch+feature tiled normalization with fixed (already-updated) stats."""
    x = x_ref[...].astype(jnp.float32)
    cur_mean = mean_ref[...]
    cur_var = var_ref[...]
    if unnorm:
        std = jnp.sqrt(cur_var + eps)
        y = jnp.clip(x, -5.0, 5.0)
        y = std * y + cur_mean
    elif norm_only:
        y = x * jax.lax.rsqrt(cur_var + eps)
    else:
        y = (x - cur_mean) * jax.lax.rsqrt(cur_var + eps)
        y = jnp.clip(y, -5.0, 5.0)
    y_ref[...] = y.astype(y_ref.dtype)


# --------------------------------------------------------------------------- #
# Wrapper
# --------------------------------------------------------------------------- #
@functools.partial(jax.jit,
                   static_argnames=("training", "unnorm", "norm_only", "eps",
                                    "force_two_pass", "max_batch_tile"))
def running_mean_std_forward(x, running_mean, running_var, count, *,
                             training=True, unnorm=False, norm_only=False,
                             eps=EPS, force_two_pass=False, max_batch_tile=None):
    """Forward of RunningMeanStd(insize=(F,), per_channel=False).

    x: (B, F). Returns (y, new_running_mean, new_running_var, new_count).
    """
    B, F = x.shape
    itemsize = jnp.dtype(x.dtype).itemsize
    vmem_limit, tile_budget = _vmem_limits()

    rm2 = running_mean.astype(jnp.float32).reshape(1, F)
    rv2 = running_var.astype(jnp.float32).reshape(1, F)
    cnt_f = jnp.asarray(count, jnp.float32).reshape(())
    cnt2 = cnt_f.reshape(1, 1)

    # Fused single-pass kernel keeps the full batch column resident per feature
    # tile; fall back to the batch-tiled two-pass path when even a 128-lane
    # column of x no longer fits the per-tile VMEM budget (large B, e.g. v7x).
    fused_ok = (_bytes_per_elem(itemsize) * B * min(F, 128) <= tile_budget
                and not force_two_pass)

    if fused_ok:
        tf = _pick_feature_tile(B, F, itemsize, tile_budget)
        grid = (pl.cdiv(F, tf),)
        y, new_rm2, new_rv2 = pl.pallas_call(
            functools.partial(_fused_kernel,
                              batch_count=float(B), training=training,
                              unnorm=unnorm, norm_only=norm_only, eps=float(eps)),
            out_shape=(jax.ShapeDtypeStruct((B, F), x.dtype),
                       jax.ShapeDtypeStruct((1, F), jnp.float32),
                       jax.ShapeDtypeStruct((1, F), jnp.float32)),
            grid=grid,
            in_specs=[
                pl.BlockSpec((B, tf), lambda j: (0, j)),
                pl.BlockSpec((1, tf), lambda j: (0, j)),
                pl.BlockSpec((1, tf), lambda j: (0, j)),
                pl.BlockSpec(memory_space=pltpu.MemorySpace.SMEM),   # count scalar
            ],
            out_specs=(
                pl.BlockSpec((B, tf), lambda j: (0, j)),
                pl.BlockSpec((1, tf), lambda j: (0, j)),
                pl.BlockSpec((1, tf), lambda j: (0, j)),
            ),
            input_output_aliases={1: 1, 2: 2},        # stats updated in place
            compiler_params=pltpu.CompilerParams(
                dimension_semantics=("parallel",),
                vmem_limit_bytes=vmem_limit,
            ),
        )(x, rm2, rv2, cnt2)
    else:
        tf, tb = _pick_two_pass_tiles(B, F, itemsize, tile_budget, max_batch_tile)
        nf, nb = pl.cdiv(F, tf), pl.cdiv(B, tb)
        if training:
            new_rm2, new_rv2 = pl.pallas_call(
                functools.partial(_stats_kernel, batch_count=B, batch_tile=tb,
                                  mask_batch=(B % tb != 0)),
                out_shape=(jax.ShapeDtypeStruct((1, F), jnp.float32),
                           jax.ShapeDtypeStruct((1, F), jnp.float32)),
                grid=(nf, nb),
                in_specs=[
                    pl.BlockSpec((tb, tf), lambda j, b: (b, j)),
                    pl.BlockSpec((1, tf), lambda j, b: (0, j)),
                    pl.BlockSpec((1, tf), lambda j, b: (0, j)),
                    pl.BlockSpec(memory_space=pltpu.MemorySpace.SMEM),
                ],
                out_specs=(
                    pl.BlockSpec((1, tf), lambda j, b: (0, j)),
                    pl.BlockSpec((1, tf), lambda j, b: (0, j)),
                ),
                scratch_shapes=[pltpu.VMEM((1, tf), jnp.float32),
                                pltpu.VMEM((1, tf), jnp.float32)],
                input_output_aliases={1: 0, 2: 1},
                compiler_params=pltpu.CompilerParams(
                    dimension_semantics=("parallel", "arbitrary"),
                    vmem_limit_bytes=vmem_limit,
                ),
            )(x, rm2, rv2, cnt2)
            cur_mean, cur_var = new_rm2, new_rv2
        else:
            new_rm2, new_rv2 = rm2, rv2
            cur_mean, cur_var = rm2, rv2

        y = pl.pallas_call(
            functools.partial(_apply_kernel, unnorm=unnorm,
                              norm_only=norm_only, eps=float(eps)),
            out_shape=jax.ShapeDtypeStruct((B, F), x.dtype),
            grid=(nf, nb),
            in_specs=[
                pl.BlockSpec((tb, tf), lambda j, b: (b, j)),
                pl.BlockSpec((1, tf), lambda j, b: (0, j)),
                pl.BlockSpec((1, tf), lambda j, b: (0, j)),
            ],
            out_specs=pl.BlockSpec((tb, tf), lambda j, b: (b, j)),
            compiler_params=pltpu.CompilerParams(
                dimension_semantics=("parallel", "parallel"),
                vmem_limit_bytes=vmem_limit,
            ),
        )(x, cur_mean, cur_var)

    new_rm = new_rm2[0]
    new_rv = new_rv2[0]
    new_count = cnt_f + jnp.float32(B) if training else cnt_f
    return y, new_rm, new_rv, new_count


# --------------------------------------------------------------------------- #
# Reference + tests
# --------------------------------------------------------------------------- #
def _reference(x, rm, rv, cnt, training=True, eps=EPS):
    x = np.asarray(x, np.float32)
    rm = np.asarray(rm, np.float32)
    rv = np.asarray(rv, np.float32)
    cnt = np.float32(cnt)
    B = x.shape[0]
    if training:
        bm = x.mean(0)
        bv = x.var(0, ddof=1)
        delta = bm - rm
        tot = cnt + B
        new_mean = rm + delta * B / tot
        m2 = rv * cnt + bv * B + delta ** 2 * cnt * B / tot
        new_var = m2 / tot
        new_cnt = tot
    else:
        new_mean, new_var, new_cnt = rm, rv, cnt
    y = np.clip((x - new_mean) / np.sqrt(new_var + eps), -5.0, 5.0)
    return y, new_mean, new_var, new_cnt


if __name__ == "__main__":
    key = jax.random.PRNGKey(0)

    def check_training(B, F, **kw):
        k = jax.random.fold_in(key, B * 1009 + F)
        x = jax.random.normal(k, (B, F), dtype=jnp.float32) * 2.0 + 0.5
        rm = jnp.zeros((F,), jnp.float32)
        rv = jnp.ones((F,), jnp.float32)
        cnt = jnp.ones((), jnp.float32)
        out = running_mean_std_forward(x, rm, rv, cnt, training=True, **kw)
        jax.block_until_ready(out)
        y, nrm, nrv, ncnt = out
        y_r, rm_r, rv_r, cnt_r = _reference(x, rm, rv, 1.0, training=True)
        np.testing.assert_allclose(np.asarray(y), y_r, rtol=1e-5, atol=1e-5)
        np.testing.assert_allclose(np.asarray(nrm), rm_r, rtol=1e-5, atol=1e-5)
        np.testing.assert_allclose(np.asarray(nrv), rv_r, rtol=1e-5, atol=1e-5)
        np.testing.assert_allclose(np.asarray(ncnt), cnt_r, rtol=1e-6)
        return x, nrm, nrv, ncnt, rm_r, rv_r, cnt_r

    # 1) fused path, small F (RunningMeanStd(insize=(32,)), batch=8)
    x1, nrm1, nrv1, ncnt1, rm_r1, rv_r1, cnt_r1 = check_training(8, 32)

    # 2) fused path with a ragged last feature tile (F % 128 != 0, no pad/slice)
    check_training(16, 200)

    # 3) batch-tiled two-pass path (forced), with partial batch & feature tiles
    check_training(20, 160, force_two_pass=True, max_batch_tile=8)

    # 4) eval-mode forward (stats frozen), fused path
    y_e, rm_e, rv_e, cnt_e = running_mean_std_forward(
        x1, nrm1, nrv1, ncnt1, training=False)
    jax.block_until_ready(y_e)
    y_e_ref = np.clip((np.asarray(x1) - rm_r1) / np.sqrt(rv_r1 + EPS), -5.0, 5.0)
    np.testing.assert_allclose(np.asarray(y_e), y_e_ref, rtol=1e-5, atol=1e-5)
    np.testing.assert_allclose(np.asarray(rm_e), rm_r1, rtol=1e-6, atol=1e-6)
    np.testing.assert_allclose(np.asarray(cnt_e), cnt_r1, rtol=1e-6)

    print("KERNEL_OK")
</pallas_src>

<mosaic_0001>
module attributes {stable_mosaic.version = 11 : i64} {
  func.func @_fused_kernel(%arg0: i32, %arg1: memref<8x32xf32, #tpu.memory_space<vmem>>, %arg2: memref<1x32xf32, #tpu.memory_space<vmem>>, %arg3: memref<1x32xf32, #tpu.memory_space<vmem>>, %arg4: memref<1x1xf32, #tpu.memory_space<smem>>, %arg5: memref<8x32xf32, #tpu.memory_space<vmem>>, %arg6: memref<1x32xf32, #tpu.memory_space<vmem>>, %arg7: memref<1x32xf32, #tpu.memory_space<vmem>>) attributes {dimension_semantics = [#tpu.dimension_semantics<parallel>], iteration_bounds = array<i64: 1>, scalar_prefetch = 0 : i64, scratch_operands = 0 : i64, tpu.core_type = #tpu.core_type<tc>, window_params = [{transform_indices = @transform_0, window_bounds = array<i64: 8, 32>}, {transform_indices = @transform_1, window_bounds = array<i64: 1, 32>}, {transform_indices = @transform_2, window_bounds = array<i64: 1, 32>}, {transform_indices = @transform_3, window_bounds = array<i64: 1, 1>}, {transform_indices = @transform_4, window_bounds = array<i64: 8, 32>}, {transform_indices = @transform_5, window_bounds = array<i64: 1, 32>}, {transform_indices = @transform_6, window_bounds = array<i64: 1, 32>}]} {
    %c0 = arith.constant 0 : index
    %c0_0 = arith.constant 0 : index
    %0 = vector.load %arg1[%c0, %c0_0] : memref<8x32xf32, #tpu.memory_space<vmem>>, vector<8x32xf32>
    %c0_1 = arith.constant 0 : index
    %c0_2 = arith.constant 0 : index
    %1 = vector.load %arg2[%c0_1, %c0_2] : memref<1x32xf32, #tpu.memory_space<vmem>>, vector<1x32xf32>
    %c0_3 = arith.constant 0 : index
    %c0_4 = arith.constant 0 : index
    %2 = vector.load %arg3[%c0_3, %c0_4] : memref<1x32xf32, #tpu.memory_space<vmem>>, vector<1x32xf32>
    %c0_5 = arith.constant 0 : index
    %c0_6 = arith.constant 0 : index
    %3 = memref.load %arg4[%c0_5, %c0_6] : memref<1x1xf32, #tpu.memory_space<smem>>
    %cst = arith.constant dense<0.000000e+00> : vector<32xf32>
    %4 = vector.multi_reduction <add>, %0, %cst [0] : vector<8x32xf32> to vector<32xf32>
    %5 = vector.shape_cast %4 : vector<32xf32> to vector<1x32xf32>
    %cst_7 = arith.constant 8.000000e+00 : f32
    %6 = vector.broadcast %cst_7 : f32 to vector<1x32xf32>
    %7 = arith.divf %5, %6 : vector<1x32xf32>
    %8 = vector.broadcast %7 : vector<1x32xf32> to vector<8x32xf32>
    %9 = arith.subf %0, %8 : vector<8x32xf32>
    %10 = arith.mulf %9, %9 : vector<8x32xf32>
    %cst_8 = arith.constant dense<0.000000e+00> : vector<32xf32>
    %11 = vector.multi_reduction <add>, %10, %cst_8 [0] : vector<8x32xf32> to vector<32xf32>
    %12 = vector.shape_cast %11 : vector<32xf32> to vector<1x32xf32>
    %cst_9 = arith.constant 0.142857149 : f32
    %13 = vector.broadcast %cst_9 : f32 to vector<1x32xf32>
    %14 = arith.mulf %12, %13 : vector<1x32xf32>
    %15 = arith.subf %7, %1 : vector<1x32xf32>
    %cst_10 = arith.constant 8.000000e+00 : f32
    %16 = arith.addf %3, %cst_10 : f32
    %cst_11 = arith.constant 1.000000e+00 : f32
    %17 = arith.divf %cst_11, %16 : f32
    %cst_12 = arith.constant 8.000000e+00 : f32
    %18 = arith.mulf %cst_12, %17 : f32
    %19 = vector.broadcast %18 : f32 to vector<1x32xf32>
    %20 = arith.mulf %15, %19 : vector<1x32xf32>
    %21 = arith.addf %1, %20 : vector<1x32xf32>
    %22 = vector.broadcast %3 : f32 to vector<1x32xf32>
    %23 = arith.mulf %2, %22 : vector<1x32xf32>
    %cst_13 = arith.constant 8.000000e+00 : f32
    %24 = vector.broadcast %cst_13 : f32 to vector<1x32xf32>
    %25 = arith.mulf %14, %24 : vector<1x32xf32>
    %26 = arith.addf %23, %25 : vector<1x32xf32>
    %27 = arith.mulf %15, %15 : vector<1x32xf32>
    %cst_14 = arith.constant 8.000000e+00 : f32
    %28 = arith.mulf %3, %cst_14 : f32
    %29 = arith.mulf %28, %17 : f32
    %30 = vector.broadcast %29 : f32 to vector<1x32xf32>
    %31 = arith.mulf %27, %30 : vector<1x32xf32>
    %32 = arith.addf %26, %31 : vector<1x32xf32>
    %33 = vector.broadcast %17 : f32 to vector<1x32xf32>
    %34 = arith.mulf %32, %33 : vector<1x32xf32>
    %c0_15 = arith.constant 0 : index
    %c0_16 = arith.constant 0 : index
    %35 = vector.load %arg6[%c0_15, %c0_16] : memref<1x32xf32, #tpu.memory_space<vmem>>, vector<1x32xf32>
    tpu.vector_store %arg6[%c0_15, %c0_16], %21 {strides = array<i32>} : memref<1x32xf32, #tpu.memory_space<vmem>>, vector<1x32xf32>,
    %c0_17 = arith.constant 0 : index
    %c0_18 = arith.constant 0 : index
    %36 = vector.load %arg7[%c0_17, %c0_18] : memref<1x32xf32, #tpu.memory_space<vmem>>, vector<1x32xf32>
    tpu.vector_store %arg7[%c0_17, %c0_18], %34 {strides = array<i32>} : memref<1x32xf32, #tpu.memory_space<vmem>>, vector<1x32xf32>,
    %37 = vector.broadcast %21 : vector<1x32xf32> to vector<8x32xf32>
    %38 = arith.subf %0, %37 : vector<8x32xf32>
    %cst_19 = arith.constant 9.99999974E-6 : f32
    %39 = vector.broadcast %cst_19 : f32 to vector<1x32xf32>
    %40 = arith.addf %34, %39 : vector<1x32xf32>
    %41 = math.rsqrt %40 : vector<1x32xf32>
    %42 = vector.broadcast %41 : vector<1x32xf32> to vector<8x32xf32>
    %43 = arith.mulf %38, %42 : vector<8x32xf32>
    %cst_20 = arith.constant -5.000000e+00 : f32
    %cst_21 = arith.constant 5.000000e+00 : f32
    %44 = vector.broadcast %cst_20 : f32 to vector<8x32xf32>
    %45 = arith.maximumf %44, %43 : vector<8x32xf32>
    %46 = vector.broadcast %cst_21 : f32 to vector<8x32xf32>
    %47 = arith.minimumf %46, %45 : vector<8x32xf32>
    %c0_22 = arith.constant 0 : index
    %c0_23 = arith.constant 0 : index
    %48 = vector.load %arg5[%c0_22, %c0_23] : memref<8x32xf32, #tpu.memory_space<vmem>>, vector<8x32xf32>
    tpu.vector_store %arg5[%c0_22, %c0_23], %47 {strides = array<i32>} : memref<8x32xf32, #tpu.memory_space<vmem>>, vector<8x32xf32>,
    return
  }
  func.func @transform_0(%arg0: i32) -> (i32, i32) {
    %c0_i32 = arith.constant 0 : i32
    %c0_i32_0 = arith.constant 0 : i32
    return %c0_i32, %arg0 : i32, i32
  }
  func.func @transform_1(%arg0: i32) -> (i32, i32) {
    %c0_i32 = arith.constant 0 : i32
    %c0_i32_0 = arith.constant 0 : i32
    return %c0_i32, %arg0 : i32, i32
  }
  func.func @transform_2(%arg0: i32) -> (i32, i32) {
    %c0_i32 = arith.constant 0 : i32
    %c0_i32_0 = arith.constant 0 : i32
    return %c0_i32, %arg0 : i32, i32
  }
  func.func @transform_3(%arg0: i32) -> (i32, i32) {
    %c0_i32 = arith.constant 0 : i32
    %c0_i32_0 = arith.constant 0 : i32
    %c0_i32_1 = arith.constant 0 : i32
    return %c0_i32, %c0_i32_0 : i32, i32
  }
  func.func @transform_4(%arg0: i32) -> (i32, i32) {
    %c0_i32 = arith.constant 0 : i32
    %c0_i32_0 = arith.constant 0 : i32
    return %c0_i32, %arg0 : i32, i32
  }
  func.func @transform_5(%arg0: i32) -> (i32, i32) {
    %c0_i32 = arith.constant 0 : i32
    %c0_i32_0 = arith.constant 0 : i32
    return %c0_i32, %arg0 : i32, i32
  }
  func.func @transform_6(%arg0: i32) -> (i32, i32) {
    %c0_i32 = arith.constant 0 : i32
    %c0_i32_0 = arith.constant 0 : i32
    return %c0_i32, %arg0 : i32, i32
  }
}

</mosaic_0001>

<llo_original>
// kernel: running_mean_std_forward.1
$region0: #{running_mean_std_forward.1}
  #allocation0 [shape = 'u32[]', space=smem, size = 0x4, offset = 0x4, fixed_abs, tag = 'smem constant byte address 0x4 - core index']
  #allocation1 [shape = 'u32[144,128]{1,0:T(1,128)}', space=vmem, size = 0x12000, scoped, tag = 'internal scratch']
  #allocation2 [shape = 'f32[1,1]{1,0:T(1,128)S(6)}', space=smem, size = 0x200, scoped, tag = 'scoped memory for running_mean_std_forward.1']
  %s0 = inlined_call_operand.vmem [shape: f32[8,32], index: 0, kind: input, shape index: {}]
  %s1 = inlined_call_operand.vmem [shape: f32[1,32], index: 1, kind: input, shape index: {}, may-alias: {1,5}]
  %s2 = inlined_call_operand.vmem [shape: f32[1,32], index: 2, kind: input, shape index: {}, may-alias: {2,6}]
  %s3 = inlined_call_operand.<no memory space> [shape: f32[1,1], index: 3, kind: input, shape index: {}]
  %s4 = inlined_call_operand.hbm [shape: f32[8,32], index: 4, kind: output, shape index: {0}]
  %s5 = inlined_call_operand.vmem [shape: f32[1,32], index: 5, kind: output, shape index: {1}, may-alias: {1,5}]
  %s6 = inlined_call_operand.vmem [shape: f32[1,32], index: 6, kind: output, shape index: {2}, may-alias: {2,6}]
  %7 = xla_tuple %s4, %s5, %s6
  %s8 = sld [smem:[#allocation0]]
  $region42: #{running_mean_std_forward.1} parent=0
    _
  %s10 = ssub.s32 1, %s8
  %s11 = scalar_select 0, %s10, %s8
  %12 = sst [smem:[#allocation2]] %s3
  $region1: #{running_mean_std_forward.1} parent=0
    #allocation3 [shape = 'u8[4096]{0}', space=vmem, size = 0x1000, scoped, tag = 'output window, operand 0, single buffered']
    #allocation4 [shape = 's32[1]{0}', space=sflag, size = 0x4, scoped, tag = 'scoped memory for running_mean_std_forward.1']
    %13 = vsyncpa [#allocation4], 0
    // Predicated region
    $region2: #{running_mean_std_forward.1} parent=1 // pred_check
      _
    $region3: #{running_mean_std_forward.1} parent=1 // pred_check_branch
      %15 = sbr.rel (0) target = $region5
    $region4: #{running_mean_std_forward.1} parent=1 // pred_region
      _
    $region5: #{running_mean_std_forward.1} parent=1 // pred_fallthru
      _
    // Predicated region
    $region6: #{running_mean_std_forward.1} parent=1 // pred_check
      _
    $region7: #{running_mean_std_forward.1} parent=1 // pred_check_branch
      %17 = sbr.rel (0) target = $region9
    $region8: #{running_mean_std_forward.1} parent=1 // pred_region
      _
    $region9: #{running_mean_std_forward.1} parent=1 // pred_fallthru
      _
    // Predicated region
    $region10: #{running_mean_std_forward.1} parent=1 // pred_check
      _
    $region11: #{running_mean_std_forward.1} parent=1 // pred_check_branch
      %19 = sbr.rel (0) target = $region13
    $region12: #{running_mean_std_forward.1} parent=1 // pred_region
      _
    $region13: #{running_mean_std_forward.1} parent=1 // pred_fallthru
      _
    // Predicated region
    $region14: #{running_mean_std_forward.1} parent=1 // pred_check
      _
    $region15: #{running_mean_std_forward.1} parent=1 // pred_check_branch
      %21 = sbr.rel (0) target = $region17
    $region16: #{running_mean_std_forward.1} parent=1 // pred_region
      _
    $region17: #{running_mean_std_forward.1} parent=1 // pred_fallthru
      _
    %v22 = vld [vmem:[%s0] sm:$0xff]
    %v23 = vld [vmem:[%s1] sm:$0x1]
    %v24 = vld [vmem:[%s2] sm:$0x1]
    %s25 = sld [smem:[#allocation2]]
    %vm26 = vcmask 261120
    %v27 = vsel %vm26, %v22, 0.0
    %v28 = vrot.slane %v27, 4
    %v29 = vadd.f32 %v27, %v28
    %v30 = vrot.slane %v29, 2
    %v31 = vadd.f32 %v29, %v30
    %v32 = vrot.slane %v31, 1
    %v33 = vadd.f32 %v31, %v32
    %v34 = vrcp.pop 8.0
    %v35 = vmul.f32 %v33, %v34
    %v36 = vsub.f32 %v22, %v35
    %v37 = vmul.f32 %v36, %v36
    %v38 = vsel %vm26, %v37, 0.0
    %v39 = vrot.slane %v38, 4
    %v40 = vadd.f32 %v38, %v39
    %v41 = vrot.slane %v40, 2
    %v42 = vadd.f32 %v40, %v41
    %v43 = vrot.slane %v42, 1
    %v44 = vadd.f32 %v42, %v43
    %v45 = vmul.f32 %v44, 0.14285715
    %v46 = vsub.f32 %v35, %v23
    %s47 = sadd.f32 %s25, 8.0
    %v48 = vstv %s47
    %v49 = vrcp.pop %v48
    %s50 = vtos %v49
    %s51 = smul.f32 %s50, 8.0
    %v52 = vstv %s51
    %v53 = vmul.f32 %v46, %v52
    %v54 = vadd.f32 %v23, %v53
    %v55 = vstv %s25
    %v56 = vmul.f32 %v24, %v55
    %v57 = vmul.f32 %v45, 8.0
    %v58 = vadd.f32 %v56, %v57
    %v59 = vmul.f32 %v46, %v46
    %s60 = smul.f32 %s25, 8.0
    %s61 = smul.f32 %s60, %s50
    %v62 = vstv %s61
    %v63 = vmul.f32 %v59, %v62
    %v64 = vadd.f32 %v58, %v63
    %v65 = vstv %s50
    %v66 = vmul.f32 %v64, %v65
    %vm67 = vcmask 253952
    %68 = vst.msk [vmem:[%s5] sm:$0x1] %vm67, %v54
    %69 = vst.msk [vmem:[%s6] sm:$0x1] %vm67, %v66
    %v71 = vlaneseq
    %v72 = vshrl.u32 %v71, 7
    %v73 = vsub.s32 0, %v72
    %v74 = vrot.slane %v54, %v73
    %v76 = vsub.f32 %v22, %v74
    %v77 = vadd.f32 %v66, 1e-05
    %v78 = vrsqrt.pop %v77
    %v80 = vlaneseq
    %v81 = vshrl.u32 %v80, 7
    %v82 = vsub.s32 0, %v81
    %v83 = vrot.slane %v78, %v82
    %v85 = vmul.f32 %v76, %v83
    %v86 = vmax.f32 %v85, -5.0
    %v87 = vmin.f32 %v86, 5.0
    %88 = vst.msk [vmem:[#allocation3] sm:$0xff] %vm26, %v87
    // Predicated region
    $region18: #{running_mean_std_forward.1} parent=1 // pred_check
      _
    $region19: #{running_mean_std_forward.1} parent=1 // pred_check_branch
      %90 = sbr.rel (0) target = $region21
    $region20: #{running_mean_std_forward.1} parent=1 // pred_region
      %s92 = ssub.s32 128, 128
      %93 = vsyncadd [#allocation4], %s92
      %s95 = sshll.u32 [#allocation3], 4
      %s96 = int_to_ptr.vmem [resolvable:$true] %s95
      %98 = dma.vmem_to_hbm [thread:$0]  %s96, 128, %s4, [#allocation4]
    $region21: #{running_mean_std_forward.1} parent=1 // pred_fallthru
      _
    // Predicated region
    $region22: #{running_mean_std_forward.1} parent=1 // pred_check
      _
    $region23: #{running_mean_std_forward.1} parent=1 // pred_check_branch
      %100 = sbr.rel (0) target = $region25
    $region24: #{running_mean_std_forward.1} parent=1 // pred_region
      _
    $region25: #{running_mean_std_forward.1} parent=1 // pred_fallthru
      _
    // Predicated region
    $region26: #{running_mean_std_forward.1} parent=1 // pred_check
      _
    $region27: #{running_mean_std_forward.1} parent=1 // pred_check_branch
      %102 = sbr.rel (0) target = $region29
    $region28: #{running_mean_std_forward.1} parent=1 // pred_region
      _
    $region29: #{running_mean_std_forward.1} parent=1 // pred_fallthru
      _
    // Predicated region
    $region30: #{running_mean_std_forward.1} parent=1 // pred_check
      _
    $region31: #{running_mean_std_forward.1} parent=1 // pred_check_branch
      %104 = sbr.rel (0) target = $region33
    $region32: #{running_mean_std_forward.1} parent=1 // pred_region
      %105 = dma.done [#allocation4], 128
    $region33: #{running_mean_std_forward.1} parent=1 // pred_fallthru
      _
    // Predicated region
    $region34: #{running_mean_std_forward.1} parent=1 // pred_check
      _
    $region35: #{running_mean_std_forward.1} parent=1 // pred_check_branch
      %107 = sbr.rel (0) target = $region37
    $region36: #{running_mean_std_forward.1} parent=1 // pred_region
      _
    $region37: #{running_mean_std_forward.1} parent=1 // pred_fallthru
      _
    // Predicated region
    $region38: #{running_mean_std_forward.1} parent=1 // pred_check
      _
    $region39: #{running_mean_std_forward.1} parent=1 // pred_check_branch
      %109 = sbr.rel (0) target = $region41
    $region40: #{running_mean_std_forward.1} parent=1 // pred_region
      _
    $region41: #{running_mean_std_forward.1} parent=1 // pred_fallthru
      _
    %110 = vsyncpa [#allocation4], 1

</llo_original>
